<compile_context>
chip_gen: v7x
topology: tpu7x:2x2x1
jax: 0.10.0
libtpu: 0.0.40
codegen_flags: <defaults>
</compile_context>

<pallas_src>
import math
from functools import lru_cache, partial

import numpy as np
import jax
import jax.numpy as jnp
from jax.experimental import pallas as pl
from jax.experimental.pallas import tpu as pltpu


@lru_cache(maxsize=None)
def build_quantum_constants(n_qubits):
    """Data-independent constants (host side, cached).

    Returns (column-convention, psi is a (D, batch) column stack):
      a_mats : (n_qubits, D, D)  A_q = -iY on wire q (real), psi <- (c I + s A_q) psi
      p_chain: (D, D)            CNOT chain CNOT(0,1)..CNOT(n-2,n-1), psi <- P psi
      z_col  : (D, 1)            diagonal of sum_i Z_i
    """
    D = 2 ** n_qubits
    A2 = np.array([[0.0, -1.0], [1.0, 0.0]], dtype=np.float64)  # -i*Y (real)
    a_mats = np.stack([
        np.kron(np.kron(np.eye(2 ** q), A2), np.eye(2 ** (n_qubits - 1 - q)))
        for q in range(n_qubits)
    ]).astype(np.float32)

    P = np.eye(D)
    for c in range(n_qubits - 1):
        t = c + 1
        C = np.zeros((D, D))
        for i in range(D):
            cb = (i >> (n_qubits - 1 - c)) & 1
            j = i ^ (cb << (n_qubits - 1 - t))
            C[j, i] = 1.0
        P = C @ P
    p_chain = P.astype(np.float32)

    z_col = np.zeros((D, 1), dtype=np.float32)
    for s in range(D):
        z_col[s, 0] = sum(1 - 2 * ((s >> (n_qubits - 1 - q)) & 1)
                          for q in range(n_qubits))
    return a_mats, p_chain, z_col


def build_u_var(qweights, p_chain, n_qubits, n_layers):
    """Fold all variational RY layers + CNOT chains into one DxD matrix (differentiable).

    Each layer's simultaneous single-wire RY gates are built as one Kronecker product of
    2x2 rotations (O(D^2)), instead of n_qubits successive DxD matmuls.
    """
    D = 2 ** n_qubits
    w = qweights.reshape(n_layers, n_qubits).astype(jnp.float32)
    c = jnp.cos(0.5 * w)
    s = jnp.sin(0.5 * w)
    P = jnp.asarray(p_chain)
    U = jnp.eye(D, dtype=jnp.float32)
    for layer in range(n_layers):
        R = jnp.ones((1, 1), dtype=jnp.float32)
        for q in range(n_qubits):
            r2 = jnp.array([[c[layer, q], -s[layer, q]],
                            [s[layer, q], c[layer, q]]], dtype=jnp.float32)
            R = jnp.kron(R, r2)          # qubit 0 is the most-significant kron factor
        U = P @ (R @ U)
    return U


def make_kernel(n_qubits, D):
    inv_sqrt2 = 1.0 / math.sqrt(2.0)

    def kernel(xT_ref, wgT_ref, bg_ref, wpqT_ref, bpq_ref, u_ref, z_ref, out_ref):
        xT = xT_ref[...]                                              # (in, TB) batch on lanes

        # synthetic pretrained "graph" network: Linear + ReLU (f32 dots; the
        # bf16 x bf16 -> f32 mixed dot is not supported by the CPU/interpret executor
        # and the matrices are tiny, so f32 throughout).
        hT = jnp.dot(wgT_ref[...], xT, preferred_element_type=jnp.float32) + bg_ref[...]
        hT = jnp.maximum(hT, 0.0)                                     # (hidden, TB)

        # pre_q linear: (hidden, TB) -> (nq_pad, TB); rows >= n_qubits are zero padding
        gT = jnp.dot(wpqT_ref[...], hT, preferred_element_type=jnp.float32) + bpq_ref[...]

        # RYAngleLayer encoding theta = atan(g) + pi/2; cos/sin(theta/2) via identities:
        #   cos(a) = 1/sqrt(1+g^2), sin(a) = g/sqrt(1+g^2),  a = atan(g)
        #   cos(a/2) = sqrt((1+cos a)/2),  sin(a/2) = sin(a)/(2 cos(a/2))
        #   cos(theta/2) = (cos(a/2)-sin(a/2))/sqrt(2),  sin(theta/2) = (cos(a/2)+sin(a/2))/sqrt(2)
        r = jax.lax.rsqrt(1.0 + gT * gT)                              # cos(a)
        cos_half_a = jnp.sqrt(0.5 * (1.0 + r))
        sin_half_a = 0.5 * (gT * r) * pl.reciprocal(cos_half_a, approx=True)
        c_enc = (cos_half_a - sin_half_a) * inv_sqrt2                 # (nq_pad, TB)
        s_enc = (cos_half_a + sin_half_a) * inv_sqrt2                 # (nq_pad, TB)

        # Encoded product state (VPU only): psi[s, b] = prod_q (bit_q(s) ? s_enc : c_enc)
        # Bit masks are derived on a (D, 1) column (cheap); only select + multiply are (D, TB).
        srow = jax.lax.broadcasted_iota(jnp.int32, (D, 1), 0)         # basis index per sublane
        psi = None
        for q in range(n_qubits):
            bit = (srow >> (n_qubits - 1 - q)) & 1                    # (D, 1)
            factor = jnp.where(bit == 1, s_enc[q:q + 1, :], c_enc[q:q + 1, :])
            psi = factor if psi is None else psi * factor             # (D, TB)

        # Folded variational circuit: one DxD matmul.
        psi = jnp.dot(u_ref[...], psi, preferred_element_type=jnp.float32)

        # sum_i <Z_i>: VPU multiply by the Z diagonal + sublane reduce -> lane-dense (1, TB)
        out_ref[...] = jnp.sum(z_ref[...] * (psi * psi), axis=0, keepdims=True)

    return kernel


@partial(jax.jit, static_argnames=("n_qubits", "n_layers"))
def hqgnn_forward(data, wg, bg, wpq, bpq, qweights, *, n_qubits, n_layers):
    B, in_size = data.shape
    hidden = wg.shape[1]
    D = 2 ** n_qubits
    nq_pad = ((n_qubits + 7) // 8) * 8                                # 8-sublane granularity

    a_mats, p_chain, z_col = build_quantum_constants(n_qubits)        # cached host constants
    u_var = build_u_var(qweights, p_chain, n_qubits, n_layers)        # (D, D), differentiable

    # Batch-on-lane layout; pad B to a multiple of 128 so every lane tile / the output
    # store is lane-dense, then slice back to B at the end.
    B_pad = ((B + 127) // 128) * 128
    xT = jnp.zeros((in_size, B_pad), jnp.float32).at[:, :B].set(data.T.astype(jnp.float32))
    wgT = wg.T.astype(jnp.float32)                                    # (hidden, in)
    bg_col = bg.reshape(-1, 1).astype(jnp.float32)                    # (hidden, 1)
    wpqT = jnp.zeros((nq_pad, hidden), jnp.float32).at[:n_qubits, :].set(wpq.T)
    bpq_col = jnp.zeros((nq_pad, 1), jnp.float32).at[:n_qubits, :].set(bpq.reshape(-1, 1))

    # Batch tile: largest lane-aligned candidate dividing the padded batch.
    # (Resident constants are tiny here; for D >= 512 cap TB / set vmem_limit_bytes.)
    TB = 128
    for cand in (512, 256, 128):
        if B_pad % cand == 0:
            TB = cand
            break
    grid = (B_pad // TB,)

    flops = 2 * B_pad * (in_size * hidden + hidden * nq_pad + D * D) + 10 * B_pad * D
    bytes_accessed = 4 * (in_size * B_pad + wg.size + bg.size
                          + nq_pad * hidden + nq_pad + D * D + D + B_pad)
    cost = pl.CostEstimate(flops=int(flops),
                           transcendentals=int(3 * B_pad * nq_pad),
                           bytes_accessed=int(bytes_accessed))

    resident = lambda i: (0, 0)
    out = pl.pallas_call(
        make_kernel(n_qubits, D),
        out_shape=jax.ShapeDtypeStruct((1, B_pad), jnp.float32),
        grid=grid,
        in_specs=[
            pl.BlockSpec((in_size, TB), lambda i: (0, i)),            # data tile (streamed)
            pl.BlockSpec((hidden, in_size), resident),                # graph weight (resident)
            pl.BlockSpec((hidden, 1), resident),                      # graph bias
            pl.BlockSpec((nq_pad, hidden), resident),                 # pre_q weight (padded)
            pl.BlockSpec((nq_pad, 1), resident),                      # pre_q bias (padded)
            pl.BlockSpec((D, D), resident),                           # folded variational unitary
            pl.BlockSpec((D, 1), resident),                           # sum_i Z_i diagonal
        ],
        out_specs=pl.BlockSpec((1, TB), lambda i: (0, i)),
        compiler_params=pltpu.CompilerParams(
            dimension_semantics=("parallel",)),
        cost_estimate=cost,
    )(xT, wgT, bg_col, wpqT, bpq_col, u_var, jnp.asarray(z_col))
    return out[0, :B]


def reference_forward(data, wg, bg, wpq, bpq, qweights, n_qubits, n_layers):
    """Pure-JAX reference with the literal atan / per-gate statevector simulation."""
    a_mats, p_chain, z_col = build_quantum_constants(n_qubits)
    D = 2 ** n_qubits
    B = data.shape[0]
    h = jnp.maximum(data @ wg + bg, 0.0)
    g = h @ wpq + bpq
    theta = jnp.arctan(g) + 0.5 * math.pi                             # (B, n_qubits)

    psi = jnp.zeros((D, B), jnp.float32).at[0, :].set(1.0)            # column convention
    for q in range(n_qubits):
        t = theta[:, q][None, :]
        psi = jnp.cos(0.5 * t) * psi + jnp.sin(0.5 * t) * (jnp.asarray(a_mats[q]) @ psi)
    for layer in range(n_layers):
        for q in range(n_qubits):
            t = qweights[0, layer * n_qubits + q]
            psi = jnp.cos(0.5 * t) * psi + jnp.sin(0.5 * t) * (jnp.asarray(a_mats[q]) @ psi)
        psi = jnp.asarray(p_chain) @ psi
    return jnp.sum(jnp.asarray(z_col) * (psi * psi), axis=0)


if __name__ == "__main__":
    B, input_size, hidden_size = 8, 16, 32
    n_qubits, n_layers = 4, 2

    key = jax.random.PRNGKey(0)
    k = jax.random.split(key, 6)
    data = jax.random.normal(k[0], (B, input_size), jnp.float32)
    wg = jax.random.normal(k[1], (input_size, hidden_size), jnp.float32) * 0.2
    bg = jax.random.normal(k[2], (1, hidden_size), jnp.float32) * 0.1
    wpq = jax.random.normal(k[3], (hidden_size, n_qubits), jnp.float32) * 0.2
    bpq = jax.random.normal(k[4], (1, n_qubits), jnp.float32) * 0.1
    qweights = jax.random.uniform(k[5], (1, n_layers * n_qubits), jnp.float32,
                                  minval=0.0, maxval=2.0 * math.pi)

    out = hqgnn_forward(data, wg, bg, wpq, bpq, qweights,
                        n_qubits=n_qubits, n_layers=n_layers)
    out = jax.block_until_ready(out)

    ref = reference_forward(data, wg, bg, wpq, bpq, qweights, n_qubits, n_layers)
    ref = jax.block_until_ready(ref)

    assert out.shape == (B,)
    assert np.all(np.isfinite(np.asarray(out)))
    assert np.allclose(np.asarray(out), np.asarray(ref), rtol=3e-2, atol=3e-2), (
        np.asarray(out), np.asarray(ref))
    print("KERNEL_OK")
</pallas_src>

<mosaic_0001>
module attributes {stable_mosaic.version = 11 : i64} {
  func.func @kernel(%arg0: i32, %arg1: memref<16x128xf32, #tpu.memory_space<vmem>>, %arg2: memref<32x16xf32, #tpu.memory_space<vmem>>, %arg3: memref<32x1xf32, #tpu.memory_space<vmem>>, %arg4: memref<8x32xf32, #tpu.memory_space<vmem>>, %arg5: memref<8x1xf32, #tpu.memory_space<vmem>>, %arg6: memref<16x16xf32, #tpu.memory_space<vmem>>, %arg7: memref<16x1xf32, #tpu.memory_space<vmem>>, %arg8: memref<1x128xf32, #tpu.memory_space<vmem>>) attributes {dimension_semantics = [#tpu.dimension_semantics<parallel>], iteration_bounds = array<i64: 1>, scalar_prefetch = 0 : i64, scratch_operands = 0 : i64, tpu.core_type = #tpu.core_type<tc>, window_params = [{transform_indices = @transform_0, window_bounds = array<i64: 16, 128>}, {pipeline_mode = #tpu.pipeline_mode<synchronous>, transform_indices = @transform_1, window_bounds = array<i64: 32, 16>}, {pipeline_mode = #tpu.pipeline_mode<synchronous>, transform_indices = @transform_2, window_bounds = array<i64: 32, 1>}, {pipeline_mode = #tpu.pipeline_mode<synchronous>, transform_indices = @transform_3, window_bounds = array<i64: 8, 32>}, {pipeline_mode = #tpu.pipeline_mode<synchronous>, transform_indices = @transform_4, window_bounds = array<i64: 8, 1>}, {pipeline_mode = #tpu.pipeline_mode<synchronous>, transform_indices = @transform_5, window_bounds = array<i64: 16, 16>}, {pipeline_mode = #tpu.pipeline_mode<synchronous>, transform_indices = @transform_6, window_bounds = array<i64: 16, 1>}, {transform_indices = @transform_7, window_bounds = array<i64: 1, 128>}]} {
    %c0 = arith.constant 0 : index
    %c0_0 = arith.constant 0 : index
    %0 = vector.load %arg1[%c0, %c0_0] : memref<16x128xf32, #tpu.memory_space<vmem>>, vector<16x128xf32>
    %c0_1 = arith.constant 0 : index
    %c0_2 = arith.constant 0 : index
    %1 = vector.load %arg2[%c0_1, %c0_2] : memref<32x16xf32, #tpu.memory_space<vmem>>, vector<32x16xf32>
    %cst = arith.constant dense<0.000000e+00> : vector<32x128xf32>
    %2 = tpu.matmul %1, %0, %cst {dimension_numbers = #tpu.dot_dimension_numbers<[1], [0], [0], [1], [0, 0, 1, 1], [], []>} : vector<32x16xf32>, vector<16x128xf32>, vector<32x128xf32> -> vector<32x128xf32>
    %c0_3 = arith.constant 0 : index
    %c0_4 = arith.constant 0 : index
    %3 = vector.load %arg3[%c0_3, %c0_4] : memref<32x1xf32, #tpu.memory_space<vmem>>, vector<32x1xf32>
    %4 = vector.broadcast %3 : vector<32x1xf32> to vector<32x128xf32>
    %5 = arith.addf %2, %4 : vector<32x128xf32>
    %cst_5 = arith.constant 0.000000e+00 : f32
    %6 = vector.broadcast %cst_5 : f32 to vector<32x128xf32>
    %7 = arith.maximumf %5, %6 : vector<32x128xf32>
    %c0_6 = arith.constant 0 : index
    %c0_7 = arith.constant 0 : index
    %8 = vector.load %arg4[%c0_6, %c0_7] : memref<8x32xf32, #tpu.memory_space<vmem>>, vector<8x32xf32>
    %cst_8 = arith.constant dense<0.000000e+00> : vector<8x128xf32>
    %9 = tpu.matmul %8, %7, %cst_8 {dimension_numbers = #tpu.dot_dimension_numbers<[1], [0], [0], [1], [0, 0, 1, 1], [], []>} : vector<8x32xf32>, vector<32x128xf32>, vector<8x128xf32> -> vector<8x128xf32>
    %c0_9 = arith.constant 0 : index
    %c0_10 = arith.constant 0 : index
    %10 = vector.load %arg5[%c0_9, %c0_10] : memref<8x1xf32, #tpu.memory_space<vmem>>, vector<8x1xf32>
    %11 = vector.broadcast %10 : vector<8x1xf32> to vector<8x128xf32>
    %12 = arith.addf %9, %11 : vector<8x128xf32>
    %13 = arith.mulf %12, %12 : vector<8x128xf32>
    %cst_11 = arith.constant 1.000000e+00 : f32
    %14 = vector.broadcast %cst_11 : f32 to vector<8x128xf32>
    %15 = arith.addf %14, %13 : vector<8x128xf32>
    %16 = math.rsqrt %15 : vector<8x128xf32>
    %cst_12 = arith.constant 1.000000e+00 : f32
    %17 = vector.broadcast %cst_12 : f32 to vector<8x128xf32>
    %18 = arith.addf %17, %16 : vector<8x128xf32>
    %cst_13 = arith.constant 5.000000e-01 : f32
    %19 = vector.broadcast %cst_13 : f32 to vector<8x128xf32>
    %20 = arith.mulf %19, %18 : vector<8x128xf32>
    %21 = math.sqrt %20 : vector<8x128xf32>
    %22 = arith.mulf %12, %16 : vector<8x128xf32>
    %cst_14 = arith.constant 5.000000e-01 : f32
    %23 = vector.broadcast %cst_14 : f32 to vector<8x128xf32>
    %24 = arith.mulf %23, %22 : vector<8x128xf32>
    %25 = tpu.reciprocal %21 {approx = true} : vector<8x128xf32> -> vector<8x128xf32>
    %26 = arith.mulf %24, %25 : vector<8x128xf32>
    %27 = arith.subf %21, %26 : vector<8x128xf32>
    %cst_15 = arith.constant 0.707106769 : f32
    %28 = vector.broadcast %cst_15 : f32 to vector<8x128xf32>
    %29 = arith.mulf %27, %28 : vector<8x128xf32>
    %30 = arith.addf %21, %26 : vector<8x128xf32>
    %cst_16 = arith.constant 0.707106769 : f32
    %31 = vector.broadcast %cst_16 : f32 to vector<8x128xf32>
    %32 = arith.mulf %30, %31 : vector<8x128xf32>
    %33 = tpu.iota {dimensions = array<i32: 0>} : vector<16x1xi32>
    %c3_i32 = arith.constant 3 : i32
    %34 = vector.broadcast %c3_i32 : i32 to vector<16x1xi32>
    %35 = arith.shrsi %33, %34 : vector<16x1xi32>
    %c1_i32 = arith.constant 1 : i32
    %36 = vector.broadcast %c1_i32 : i32 to vector<16x1xi32>
    %37 = arith.andi %35, %36 : vector<16x1xi32>
    %c1_i32_17 = arith.constant 1 : i32
    %38 = vector.broadcast %c1_i32_17 : i32 to vector<16x1xi32>
    %39 = arith.cmpi eq, %37, %38 : vector<16x1xi32>
    %40 = vector.extract_strided_slice %32 {offsets = [0, 0], sizes = [1, 128], strides = [1, 1]} : vector<8x128xf32> to vector<1x128xf32>
    %41 = vector.extract_strided_slice %29 {offsets = [0, 0], sizes = [1, 128], strides = [1, 1]} : vector<8x128xf32> to vector<1x128xf32>
    %42 = vector.shape_cast %39 : vector<16x1xi1> to vector<16x1xi1>
    %43 = vector.broadcast %42 : vector<16x1xi1> to vector<16x128xi1>
    %44 = vector.shape_cast %40 : vector<1x128xf32> to vector<1x128xf32>
    %45 = vector.broadcast %44 : vector<1x128xf32> to vector<16x128xf32>
    %46 = vector.shape_cast %41 : vector<1x128xf32> to vector<1x128xf32>
    %47 = vector.broadcast %46 : vector<1x128xf32> to vector<16x128xf32>
    %48 = arith.select %43, %45, %47 : vector<16x128xi1>, vector<16x128xf32>
    %c2_i32 = arith.constant 2 : i32
    %49 = vector.broadcast %c2_i32 : i32 to vector<16x1xi32>
    %50 = arith.shrsi %33, %49 : vector<16x1xi32>
    %c1_i32_18 = arith.constant 1 : i32
    %51 = vector.broadcast %c1_i32_18 : i32 to vector<16x1xi32>
    %52 = arith.andi %50, %51 : vector<16x1xi32>
    %c1_i32_19 = arith.constant 1 : i32
    %53 = vector.broadcast %c1_i32_19 : i32 to vector<16x1xi32>
    %54 = arith.cmpi eq, %52, %53 : vector<16x1xi32>
    %55 = vector.extract_strided_slice %32 {offsets = [1, 0], sizes = [1, 128], strides = [1, 1]} : vector<8x128xf32> to vector<1x128xf32>
    %56 = vector.extract_strided_slice %29 {offsets = [1, 0], sizes = [1, 128], strides = [1, 1]} : vector<8x128xf32> to vector<1x128xf32>
    %57 = vector.shape_cast %54 : vector<16x1xi1> to vector<16x1xi1>
    %58 = vector.broadcast %57 : vector<16x1xi1> to vector<16x128xi1>
    %59 = vector.shape_cast %55 : vector<1x128xf32> to vector<1x128xf32>
    %60 = vector.broadcast %59 : vector<1x128xf32> to vector<16x128xf32>
    %61 = vector.shape_cast %56 : vector<1x128xf32> to vector<1x128xf32>
    %62 = vector.broadcast %61 : vector<1x128xf32> to vector<16x128xf32>
    %63 = arith.select %58, %60, %62 : vector<16x128xi1>, vector<16x128xf32>
    %64 = arith.mulf %48, %63 : vector<16x128xf32>
    %c1_i32_20 = arith.constant 1 : i32
    %65 = vector.broadcast %c1_i32_20 : i32 to vector<16x1xi32>
    %66 = arith.shrsi %33, %65 : vector<16x1xi32>
    %c1_i32_21 = arith.constant 1 : i32
    %67 = vector.broadcast %c1_i32_21 : i32 to vector<16x1xi32>
    %68 = arith.andi %66, %67 : vector<16x1xi32>
    %c1_i32_22 = arith.constant 1 : i32
    %69 = vector.broadcast %c1_i32_22 : i32 to vector<16x1xi32>
    %70 = arith.cmpi eq, %68, %69 : vector<16x1xi32>
    %71 = vector.extract_strided_slice %32 {offsets = [2, 0], sizes = [1, 128], strides = [1, 1]} : vector<8x128xf32> to vector<1x128xf32>
    %72 = vector.extract_strided_slice %29 {offsets = [2, 0], sizes = [1, 128], strides = [1, 1]} : vector<8x128xf32> to vector<1x128xf32>
    %73 = vector.shape_cast %70 : vector<16x1xi1> to vector<16x1xi1>
    %74 = vector.broadcast %73 : vector<16x1xi1> to vector<16x128xi1>
    %75 = vector.shape_cast %71 : vector<1x128xf32> to vector<1x128xf32>
    %76 = vector.broadcast %75 : vector<1x128xf32> to vector<16x128xf32>
    %77 = vector.shape_cast %72 : vector<1x128xf32> to vector<1x128xf32>
    %78 = vector.broadcast %77 : vector<1x128xf32> to vector<16x128xf32>
    %79 = arith.select %74, %76, %78 : vector<16x128xi1>, vector<16x128xf32>
    %80 = arith.mulf %64, %79 : vector<16x128xf32>
    %c0_i32 = arith.constant 0 : i32
    %81 = vector.broadcast %c0_i32 : i32 to vector<16x1xi32>
    %82 = arith.shrsi %33, %81 : vector<16x1xi32>
    %c1_i32_23 = arith.constant 1 : i32
    %83 = vector.broadcast %c1_i32_23 : i32 to vector<16x1xi32>
    %84 = arith.andi %82, %83 : vector<16x1xi32>
    %c1_i32_24 = arith.constant 1 : i32
    %85 = vector.broadcast %c1_i32_24 : i32 to vector<16x1xi32>
    %86 = arith.cmpi eq, %84, %85 : vector<16x1xi32>
    %87 = vector.extract_strided_slice %32 {offsets = [3, 0], sizes = [1, 128], strides = [1, 1]} : vector<8x128xf32> to vector<1x128xf32>
    %88 = vector.extract_strided_slice %29 {offsets = [3, 0], sizes = [1, 128], strides = [1, 1]} : vector<8x128xf32> to vector<1x128xf32>
    %89 = vector.shape_cast %86 : vector<16x1xi1> to vector<16x1xi1>
    %90 = vector.broadcast %89 : vector<16x1xi1> to vector<16x128xi1>
    %91 = vector.shape_cast %87 : vector<1x128xf32> to vector<1x128xf32>
    %92 = vector.broadcast %91 : vector<1x128xf32> to vector<16x128xf32>
    %93 = vector.shape_cast %88 : vector<1x128xf32> to vector<1x128xf32>
    %94 = vector.broadcast %93 : vector<1x128xf32> to vector<16x128xf32>
    %95 = arith.select %90, %92, %94 : vector<16x128xi1>, vector<16x128xf32>
    %96 = arith.mulf %80, %95 : vector<16x128xf32>
    %c0_25 = arith.constant 0 : index
    %c0_26 = arith.constant 0 : index
    %97 = vector.load %arg6[%c0_25, %c0_26] : memref<16x16xf32, #tpu.memory_space<vmem>>, vector<16x16xf32>
    %cst_27 = arith.constant dense<0.000000e+00> : vector<16x128xf32>
    %98 = tpu.matmul %97, %96, %cst_27 {dimension_numbers = #tpu.dot_dimension_numbers<[1], [0], [0], [1], [0, 0, 1, 1], [], []>} : vector<16x16xf32>, vector<16x128xf32>, vector<16x128xf32> -> vector<16x128xf32>
    %c0_28 = arith.constant 0 : index
    %c0_29 = arith.constant 0 : index
    %99 = vector.load %arg7[%c0_28, %c0_29] : memref<16x1xf32, #tpu.memory_space<vmem>>, vector<16x1xf32>
    %100 = arith.mulf %98, %98 : vector<16x128xf32>
    %101 = vector.broadcast %99 : vector<16x1xf32> to vector<16x128xf32>
    %102 = arith.mulf %101, %100 : vector<16x128xf32>
    %cst_30 = arith.constant dense<0.000000e+00> : vector<128xf32>
    %103 = vector.multi_reduction <add>, %102, %cst_30 [0] : vector<16x128xf32> to vector<128xf32>
    %104 = vector.shape_cast %103 : vector<128xf32> to vector<1x128xf32>
    %c0_31 = arith.constant 0 : index
    %c0_32 = arith.constant 0 : index
    %105 = vector.load %arg8[%c0_31, %c0_32] : memref<1x128xf32, #tpu.memory_space<vmem>>, vector<1x128xf32>
    tpu.vector_store %arg8[%c0_31, %c0_32], %104 {strides = array<i32>} : memref<1x128xf32, #tpu.memory_space<vmem>>, vector<1x128xf32>,
    return
  }
  func.func @transform_0(%arg0: i32) -> (i32, i32) {
    %c0_i32 = arith.constant 0 : i32
    %c0_i32_0 = arith.constant 0 : i32
    return %c0_i32, %arg0 : i32, i32
  }
  func.func @transform_1(%arg0: i32) -> (i32, i32) {
    %c0_i32 = arith.constant 0 : i32
    %c0_i32_0 = arith.constant 0 : i32
    %c0_i32_1 = arith.constant 0 : i32
    return %c0_i32, %c0_i32_0 : i32, i32
  }
  func.func @transform_2(%arg0: i32) -> (i32, i32) {
    %c0_i32 = arith.constant 0 : i32
    %c0_i32_0 = arith.constant 0 : i32
    %c0_i32_1 = arith.constant 0 : i32
    return %c0_i32, %c0_i32_0 : i32, i32
  }
  func.func @transform_3(%arg0: i32) -> (i32, i32) {
    %c0_i32 = arith.constant 0 : i32
    %c0_i32_0 = arith.constant 0 : i32
    %c0_i32_1 = arith.constant 0 : i32
    return %c0_i32, %c0_i32_0 : i32, i32
  }
  func.func @transform_4(%arg0: i32) -> (i32, i32) {
    %c0_i32 = arith.constant 0 : i32
    %c0_i32_0 = arith.constant 0 : i32
    %c0_i32_1 = arith.constant 0 : i32
    return %c0_i32, %c0_i32_0 : i32, i32
  }
  func.func @transform_5(%arg0: i32) -> (i32, i32) {
    %c0_i32 = arith.constant 0 : i32
    %c0_i32_0 = arith.constant 0 : i32
    %c0_i32_1 = arith.constant 0 : i32
    return %c0_i32, %c0_i32_0 : i32, i32
  }
  func.func @transform_6(%arg0: i32) -> (i32, i32) {
    %c0_i32 = arith.constant 0 : i32
    %c0_i32_0 = arith.constant 0 : i32
    %c0_i32_1 = arith.constant 0 : i32
    return %c0_i32, %c0_i32_0 : i32, i32
  }
  func.func @transform_7(%arg0: i32) -> (i32, i32) {
    %c0_i32 = arith.constant 0 : i32
    %c0_i32_0 = arith.constant 0 : i32
    return %c0_i32, %arg0 : i32, i32
  }
}

</mosaic_0001>

<llo_original>
// kernel: hqgnn_forward.1
$region0: #{hqgnn_forward.1}
  #allocation0 [shape = 'u32[]', space=smem, size = 0x4, offset = 0x4, fixed_abs, tag = 'smem constant byte address 0x4 - core index']
  #allocation1 [shape = 'u32[144,128]{1,0:T(1,128)}', space=vmem, size = 0x12000, scoped, tag = 'internal scratch']
  %s0 = inlined_call_operand.vmem [shape: f32[16,128], index: 0, kind: input, shape index: {}]
  %s1 = inlined_call_operand.vmem [shape: f32[32,16], index: 1, kind: input, shape index: {}]
  %s2 = inlined_call_operand.vmem [shape: f32[32,1], index: 2, kind: input, shape index: {}]
  %s3 = inlined_call_operand.vmem [shape: f32[8,32], index: 3, kind: input, shape index: {}]
  %s4 = inlined_call_operand.vmem [shape: f32[8,1], index: 4, kind: input, shape index: {}]
  %s5 = inlined_call_operand.vmem [shape: f32[16,16], index: 5, kind: input, shape index: {}]
  %s6 = inlined_call_operand.vmem [shape: f32[16,1], index: 6, kind: input, shape index: {}]
  %s7 = inlined_call_operand.vmem [shape: f32[1,128], index: 7, kind: output, shape index: {}]
  %s8 = sld [smem:[#allocation0]]
  $region38: #{hqgnn_forward.1} parent=0
    _
  %s10 = ssub.s32 1, %s8
  %s11 = scalar_select 0, %s10, %s8
  // Predicated region
  $region2: #{hqgnn_forward.1} parent=0 // pred_check
    _
  $region3: #{hqgnn_forward.1} parent=0 // pred_check_branch
    %13 = sbr.rel (0) target = $region5
  $region4: #{hqgnn_forward.1} parent=0 // pred_region
    _
  $region5: #{hqgnn_forward.1} parent=0 // pred_fallthru
    _
  // Predicated region
  $region6: #{hqgnn_forward.1} parent=0 // pred_check
    _
  $region7: #{hqgnn_forward.1} parent=0 // pred_check_branch
    %15 = sbr.rel (0) target = $region9
  $region8: #{hqgnn_forward.1} parent=0 // pred_region
    _
  $region9: #{hqgnn_forward.1} parent=0 // pred_fallthru
    _
  // Predicated region
  $region10: #{hqgnn_forward.1} parent=0 // pred_check
    _
  $region11: #{hqgnn_forward.1} parent=0 // pred_check_branch
    %17 = sbr.rel (0) target = $region13
  $region12: #{hqgnn_forward.1} parent=0 // pred_region
    _
  $region13: #{hqgnn_forward.1} parent=0 // pred_fallthru
    _
  // Predicated region
  $region14: #{hqgnn_forward.1} parent=0 // pred_check
    _
  $region15: #{hqgnn_forward.1} parent=0 // pred_check_branch
    %19 = sbr.rel (0) target = $region17
  $region16: #{hqgnn_forward.1} parent=0 // pred_region
    _
  $region17: #{hqgnn_forward.1} parent=0 // pred_fallthru
    _
  // Predicated region
  $region18: #{hqgnn_forward.1} parent=0 // pred_check
    _
  $region19: #{hqgnn_forward.1} parent=0 // pred_check_branch
    %21 = sbr.rel (0) target = $region21
  $region20: #{hqgnn_forward.1} parent=0 // pred_region
    _
  $region21: #{hqgnn_forward.1} parent=0 // pred_fallthru
    _
  // Predicated region
  $region22: #{hqgnn_forward.1} parent=0 // pred_check
    _
  $region23: #{hqgnn_forward.1} parent=0 // pred_check_branch
    %23 = sbr.rel (0) target = $region25
  $region24: #{hqgnn_forward.1} parent=0 // pred_region
    _
  $region25: #{hqgnn_forward.1} parent=0 // pred_fallthru
    _
  // Predicated region
  $region26: #{hqgnn_forward.1} parent=0 // pred_check
    _
  $region27: #{hqgnn_forward.1} parent=0 // pred_check_branch
    %25 = sbr.rel (0) target = $region29
  $region28: #{hqgnn_forward.1} parent=0 // pred_region
    _
  $region29: #{hqgnn_forward.1} parent=0 // pred_fallthru
    _
  %v26 = vld [vmem:[%s0] sm:$0xff]
  %v27 = vld [vmem:[%s0 + $0x8] sm:$0xff]
  %v28 = vld [vmem:[%s1] sm:$0xff]
  %v29 = vld [vmem:[%s1 + $0x8] sm:$0xff]
  %v30 = vld [vmem:[%s1 + $0x10] sm:$0xff]
  %v31 = vld [vmem:[%s1 + $0x18] sm:$0xff]
  %v32 = vld [vmem:[%s2] sm:$0xff]
  %v33 = vld [vmem:[%s2 + $0x8] sm:$0xff]
  %v34 = vld [vmem:[%s2 + $0x10] sm:$0xff]
  %v35 = vld [vmem:[%s2 + $0x18] sm:$0xff]
  %37 = vset.pattern.permute.xlu0 0
  %38 = vperm.xlu0 %37, %v32
  %v39 = vpop.permute.xlu0 %38
  %42 = vset.pattern.permute.xlu0 0
  %43 = vperm.xlu0 %42, %v33
  %v44 = vpop.permute.xlu0 %43
  %47 = vset.pattern.permute.xlu0 0
  %48 = vperm.xlu0 %47, %v34
  %v49 = vpop.permute.xlu0 %48
  %52 = vset.pattern.permute.xlu0 0
  %53 = vperm.xlu0 %52, %v35
  %v54 = vpop.permute.xlu0 %53
  %vm56 = vcmask 130048
  %v58 = vsel %vm56, %v28, 0
  %v61 = vsel %vm56, %v29, 0
  %v64 = vsel %vm56, %v30, 0
  %v67 = vsel %vm56, %v31, 0
  %69 = vmatprep.subr.mxu0 0.0
  %70 = vmatpush1.msra.mxu0 %v26
  %71 = vmatprep.subr.mxu0 0.0
  %72 = vmatpush1.msra.mxu0 %v27
  %73 = vmatprep.subr.mxu0 0.0
  %74 = vmatpush1.msra.mxu0 0.0
  %75 = vmatprep.subr.mxu0 0.0
  %76 = vmatpush1.msra.mxu0 0.0
  %77 = vmatprep.subr.mxu0 0.0
  %78 = vmatpush1.msra.mxu0 0.0
  %79 = vmatprep.subr.mxu0 0.0
  %80 = vmatpush1.msra.mxu0 0.0
  %81 = vmatprep.subr.mxu0 0.0
  %82 = vmatpush1.msra.mxu0 0.0
  %83 = vmatprep.subr.mxu0 0.0
  %84 = vmatpush1.msra.mxu0 0.0
  %85 = vmatprep.subr.mxu0 0.0
  %86 = vmatpush1.msra.mxu0 0.0
  %87 = vmatprep.subr.mxu0 0.0
  %88 = vmatpush1.msra.mxu0 0.0
  %89 = vmatprep.subr.mxu0 0.0
  %90 = vmatpush1.msra.mxu0 0.0
  %91 = vmatprep.subr.mxu0 0.0
  %92 = vmatpush1.msra.mxu0 0.0
  %93 = vmatprep.subr.mxu0 0.0
  %94 = vmatpush1.msra.mxu0 0.0
  %95 = vmatprep.subr.mxu0 0.0
  %96 = vmatpush1.msra.mxu0 0.0
  %97 = vmatprep.subr.mxu0 0.0
  %98 = vmatpush1.msra.mxu0 0.0
  %99 = vmatprep.subr.mxu0 0.0
  %100 = vmatpush1.msra.mxu0 0.0
  %101 = vmatprep.subr.mxu0 0.0
  %102 = vmatpush1.msra.mxu0 0.0
  %103 = vmatprep.subr.mxu0 0.0
  %104 = vmatpush1.msra.mxu0 0.0
  %105 = vmatprep.subr.mxu0 0.0
  %106 = vmatpush1.msra.mxu0 0.0
  %107 = vmatprep.subr.mxu0 0.0
  %108 = vmatpush1.msra.mxu0 0.0
  %109 = vmatprep.subr.mxu0 0.0
  %110 = vmatpush1.msra.mxu0 0.0
  %111 = vmatprep.subr.mxu0 0.0
  %112 = vmatpush1.msra.mxu0 0.0
  %113 = vmatprep.subr.mxu0 0.0
  %114 = vmatpush1.msra.mxu0 0.0
  %115 = vmatprep.subr.mxu0 0.0
  %116 = vmatpush1.msra.mxu0 0.0
  %117 = vmatprep.subr.mxu0 0.0
  %118 = vmatpush1.msra.mxu0 0.0
  %119 = vmatprep.subr.mxu0 0.0
  %120 = vmatpush1.msra.mxu0 0.0
  %121 = vmatprep.subr.mxu0 0.0
  %122 = vmatpush1.msra.mxu0 0.0
  %123 = vmatprep.subr.mxu0 0.0
  %124 = vmatpush1.msra.mxu0 0.0
  %125 = vmatprep.subr.mxu0 0.0
  %126 = vmatpush1.msra.mxu0 0.0
  %127 = vmatprep.subr.mxu0 0.0
  %128 = vmatpush1.msra.mxu0 0.0
  %129 = vmatprep.subr.mxu0 0.0
  %130 = vmatpush1.msra.mxu0 0.0
  %131 = vmatprep.subr.mxu0 0.0
  %132 = vmatpush1.msra.mxu0 0.0
  %133 = vmatprep.mubr.f32.mxu0 0.0
  %134 = vmatmul.mubr.f32.gmra.mrb[0].mxu0 %v58
  %v135 = vpop.f32.mrb[0].mxu0
  %v136 = vadd.f32 %v39, %v135
  %v137 = vpop.f32.mrb[0].mxu0
  %138 = vmatprep.mubr.f32.mxu0 0.0
  %139 = vmatmul.mubr.f32.gmra.mrb[0].mxu0 %v61
  %v140 = vpop.f32.mrb[0].mxu0
  %v141 = vadd.f32 %v44, %v140
  %v142 = vpop.f32.mrb[0].mxu0
  %143 = vmatprep.mubr.f32.mxu0 0.0
  %144 = vmatmul.mubr.f32.gmra.mrb[0].mxu0 %v64
  %v145 = vpop.f32.mrb[0].mxu0
  %v146 = vadd.f32 %v49, %v145
  %v147 = vpop.f32.mrb[0].mxu0
  %148 = vmatprep.mubr.f32.mxu0 0.0
  %149 = vmatmul.mubr.f32.gmra.mrb[0].mxu0 %v67
  %v150 = vpop.f32.mrb[0].mxu0
  %v151 = vadd.f32 %v54, %v150
  %v152 = vpop.f32.mrb[0].mxu0
  %153 = vdwg.mxu0
  %v154 = vmax.f32 %v136, 0.0
  %v155 = vmax.f32 %v141, 0.0
  %v156 = vmax.f32 %v146, 0.0
  %v157 = vmax.f32 %v151, 0.0
  %v158 = vld [vmem:[%s3] sm:$0xff]
  %v159 = vld [vmem:[%s4] sm:$0xff]
  %161 = vset.pattern.permute.xlu0 0
  %162 = vperm.xlu0 %161, %v159
  %v163 = vpop.permute.xlu0 %162
  %vm165 = vcmask 261120
  %v167 = vsel %vm165, %v158, 0
  %169 = vmatprep.subr.mxu0 0.0
  %170 = vmatpush1.msra.mxu0 %v154
  %171 = vmatprep.subr.mxu0 0.0
  %172 = vmatpush1.msra.mxu0 %v155
  %173 = vmatprep.subr.mxu0 0.0
  %174 = vmatpush1.msra.mxu0 %v156
  %175 = vmatprep.subr.mxu0 0.0
  %176 = vmatpush1.msra.mxu0 %v157
  %177 = vmatprep.subr.mxu0 0.0
  %178 = vmatpush1.msra.mxu0 0.0
  %179 = vmatprep.subr.mxu0 0.0
  %180 = vmatpush1.msra.mxu0 0.0
  %181 = vmatprep.subr.mxu0 0.0
  %182 = vmatpush1.msra.mxu0 0.0
  %183 = vmatprep.subr.mxu0 0.0
  %184 = vmatpush1.msra.mxu0 0.0
  %185 = vmatprep.subr.mxu0 0.0
  %186 = vmatpush1.msra.mxu0 0.0
  %187 = vmatprep.subr.mxu0 0.0
  %188 = vmatpush1.msra.mxu0 0.0
  %189 = vmatprep.subr.mxu0 0.0
  %190 = vmatpush1.msra.mxu0 0.0
  %191 = vmatprep.subr.mxu0 0.0
  %192 = vmatpush1.msra.mxu0 0.0
  %193 = vmatprep.subr.mxu0 0.0
  %194 = vmatpush1.msra.mxu0 0.0
  %195 = vmatprep.subr.mxu0 0.0
  %196 = vmatpush1.msra.mxu0 0.0
  %197 = vmatprep.subr.mxu0 0.0
  %198 = vmatpush1.msra.mxu0 0.0
  %199 = vmatprep.subr.mxu0 0.0
  %200 = vmatpush1.msra.mxu0 0.0
  %201 = vmatprep.subr.mxu0 0.0
  %202 = vmatpush1.msra.mxu0 0.0
  %203 = vmatprep.subr.mxu0 0.0
  %204 = vmatpush1.msra.mxu0 0.0
  %205 = vmatprep.subr.mxu0 0.0
  %206 = vmatpush1.msra.mxu0 0.0
  %207 = vmatprep.subr.mxu0 0.0
  %208 = vmatpush1.msra.mxu0 0.0
  %209 = vmatprep.subr.mxu0 0.0
  %210 = vmatpush1.msra.mxu0 0.0
  %211 = vmatprep.subr.mxu0 0.0
  %212 = vmatpush1.msra.mxu0 0.0
  %213 = vmatprep.subr.mxu0 0.0
  %214 = vmatpush1.msra.mxu0 0.0
  %215 = vmatprep.subr.mxu0 0.0
  %216 = vmatpush1.msra.mxu0 0.0
  %217 = vmatprep.subr.mxu0 0.0
  %218 = vmatpush1.msra.mxu0 0.0
  %219 = vmatprep.subr.mxu0 0.0
  %220 = vmatpush1.msra.mxu0 0.0
  %221 = vmatprep.subr.mxu0 0.0
  %222 = vmatpush1.msra.mxu0 0.0
  %223 = vmatprep.subr.mxu0 0.0
  %224 = vmatpush1.msra.mxu0 0.0
  %225 = vmatprep.subr.mxu0 0.0
  %226 = vmatpush1.msra.mxu0 0.0
  %227 = vmatprep.subr.mxu0 0.0
  %228 = vmatpush1.msra.mxu0 0.0
  %229 = vmatprep.subr.mxu0 0.0
  %230 = vmatpush1.msra.mxu0 0.0
  %231 = vmatprep.subr.mxu0 0.0
  %232 = vmatpush1.msra.mxu0 0.0
  %233 = vmatprep.mubr.f32.mxu0 0.0
  %234 = vmatmul.mubr.f32.gmra.mrb[0].mxu0 %v167
  %v235 = vpop.f32.mrb[0].mxu0
  %v236 = vadd.f32 %v163, %v235
  %v237 = vpop.f32.mrb[0].mxu0
  %238 = vdwg.mxu0
  %v239 = vmul.f32 %v236, %v236
  %v240 = vadd.f32 %v239, 1.0
  %v241 = vrsqrt.pop %v240
  %v242 = vadd.f32 %v241, 1.0
  %v243 = vmul.f32 %v242, 0.5
  %v244 = vrsqrt.pop %v243
  %v245 = vmul.f32 %v243, %v244
  %vm246 = vcmp.eq.f32.partialorder %v243, inf
  %v247 = vsel %vm246, %v243, %v245
  %vm248 = vcmp.eq.f32.partialorder %v243, 0.0
  %v249 = vand.u32 %v243, 2147483648
  %v250 = vsel %vm248, %v249, %v247
  %v251 = vmul.f32 %v236, %v241
  %v252 = vmul.f32 %v251, 0.5
  %v253 = vrcp.pop %v250
  %v254 = vmul.f32 %v252, %v253
  %v255 = vsub.f32 %v250, %v254
  %v256 = vmul.f32 %v255, 0.70710677
  %v257 = vadd.f32 %v250, %v254
  %v258 = vmul.f32 %v257, 0.70710677
  %v259 = vlaneseq
  %v260 = vshrl.u32 %v259, 7
  %v261 = vadd.s32 %v260, 8
  %v262 = vshra.s32 %v260, 3
  %v263 = vshra.s32 %v261, 3
  %v264 = vand.u32 %v262, 1
  %v265 = vand.u32 %v263, 1
  %vm266 = vcmp.eq.s32.totalorder %v264, 1
  %vm267 = vcmp.eq.s32.totalorder %v265, 1
  %v268 = vsel %vm266, 1, 0
  %v269 = vsel %vm267, 1, 0
  %vm270 = vcmp.eq.s32.totalorder %v268, 1
  %vm271 = vcmp.eq.s32.totalorder %v269, 1
  %v272 = vlaneseq
  %v273 = vshrl.u32 %v272, 7
  %v274 = vsub.s32 0, %v273
  %v275 = vrot.slane %v258, %v274
  %v276 = vlaneseq
  %v277 = vshrl.u32 %v276, 7
  %v278 = vsub.s32 0, %v277
  %v279 = vrot.slane %v256, %v278
  %v280 = vsel %vm270, %v275, %v279
  %v281 = vsel %vm271, %v275, %v279
  %v282 = vshra.s32 %v260, 2
  %v283 = vshra.s32 %v261, 2
  %v284 = vand.u32 %v282, 1
  %v285 = vand.u32 %v283, 1
  %vm286 = vcmp.eq.s32.totalorder %v284, 1
  %vm287 = vcmp.eq.s32.totalorder %v285, 1
  %v288 = vsel %vm286, 1, 0
  %v289 = vsel %vm287, 1, 0
  %vm290 = vcmp.eq.s32.totalorder %v288, 1
  %vm291 = vcmp.eq.s32.totalorder %v289, 1
  %v292 = vlaneseq
  %v293 = vshrl.u32 %v292, 7
  %v294 = vsub.s32 1, %v293
  %v295 = vrot.slane %v258, %v294
  %v296 = vlaneseq
  %v297 = vshrl.u32 %v296, 7
  %v298 = vsub.s32 1, %v297
  %v299 = vrot.slane %v256, %v298
  %v300 = vsel %vm290, %v295, %v299
  %v301 = vsel %vm291, %v295, %v299
  %v302 = vmul.f32 %v280, %v300
  %v303 = vmul.f32 %v281, %v301
  %v304 = vshra.s32 %v260, 1
  %v305 = vshra.s32 %v261, 1
  %v306 = vand.u32 %v304, 1
  %v307 = vand.u32 %v305, 1
  %vm308 = vcmp.eq.s32.totalorder %v306, 1
  %vm309 = vcmp.eq.s32.totalorder %v307, 1
  %v310 = vsel %vm308, 1, 0
  %v311 = vsel %vm309, 1, 0
  %vm312 = vcmp.eq.s32.totalorder %v310, 1
  %vm313 = vcmp.eq.s32.totalorder %v311, 1
  %v314 = vlaneseq
  %v315 = vshrl.u32 %v314, 7
  %v316 = vsub.s32 2, %v315
  %v317 = vrot.slane %v258, %v316
  %v318 = vlaneseq
  %v319 = vshrl.u32 %v318, 7
  %v320 = vsub.s32 2, %v319
  %v321 = vrot.slane %v256, %v320
  %v322 = vsel %vm312, %v317, %v321
  %v323 = vsel %vm313, %v317, %v321
  %v324 = vmul.f32 %v302, %v322
  %v325 = vmul.f32 %v303, %v323
  %v326 = vand.u32 %v260, 1
  %v327 = vand.u32 %v261, 1
  %vm328 = vcmp.eq.s32.totalorder %v326, 1
  %vm329 = vcmp.eq.s32.totalorder %v327, 1
  %v330 = vsel %vm328, 1, 0
  %v331 = vsel %vm329, 1, 0
  %vm332 = vcmp.eq.s32.totalorder %v330, 1
  %vm333 = vcmp.eq.s32.totalorder %v331, 1
  %v334 = vlaneseq
  %v335 = vshrl.u32 %v334, 7
  %v336 = vsub.s32 3, %v335
  %v337 = vrot.slane %v258, %v336
  %v338 = vlaneseq
  %v339 = vshrl.u32 %v338, 7
  %v340 = vsub.s32 3, %v339
  %v341 = vrot.slane %v256, %v340
  %v342 = vsel %vm332, %v337, %v341
  %v343 = vsel %vm333, %v337, %v341
  %v344 = vmul.f32 %v324, %v342
  %v345 = vmul.f32 %v325, %v343
  %v346 = vld [vmem:[%s5] sm:$0xff]
  %v347 = vld [vmem:[%s5 + $0x8] sm:$0xff]
  %v349 = vsel %vm56, %v346, 0
  %v352 = vsel %vm56, %v347, 0
  %354 = vmatprep.subr.mxu0 0.0
  %355 = vmatpush1.msra.mxu0 %v344
  %356 = vmatprep.subr.mxu0 0.0
  %357 = vmatpush1.msra.mxu0 %v345
  %358 = vmatprep.subr.mxu0 0.0
  %359 = vmatpush1.msra.mxu0 0.0
  %360 = vmatprep.subr.mxu0 0.0
  %361 = vmatpush1.msra.mxu0 0.0
  %362 = vmatprep.subr.mxu0 0.0
  %363 = vmatpush1.msra.mxu0 0.0
  %364 = vmatprep.subr.mxu0 0.0
  %365 = vmatpush1.msra.mxu0 0.0
  %366 = vmatprep.subr.mxu0 0.0
  %367 = vmatpush1.msra.mxu0 0.0
  %368 = vmatprep.subr.mxu0 0.0
  %369 = vmatpush1.msra.mxu0 0.0
  %370 = vmatprep.subr.mxu0 0.0
  %371 = vmatpush1.msra.mxu0 0.0
  %372 = vmatprep.subr.mxu0 0.0
  %373 = vmatpush1.msra.mxu0 0.0
  %374 = vmatprep.subr.mxu0 0.0
  %375 = vmatpush1.msra.mxu0 0.0
  %376 = vmatprep.subr.mxu0 0.0
  %377 = vmatpush1.msra.mxu0 0.0
  %378 = vmatprep.subr.mxu0 0.0
  %379 = vmatpush1.msra.mxu0 0.0
  %380 = vmatprep.subr.mxu0 0.0
  %381 = vmatpush1.msra.mxu0 0.0
  %382 = vmatprep.subr.mxu0 0.0
  %383 = vmatpush1.msra.mxu0 0.0
  %384 = vmatprep.subr.mxu0 0.0
  %385 = vmatpush1.msra.mxu0 0.0
  %386 = vmatprep.subr.mxu0 0.0
  %387 = vmatpush1.msra.mxu0 0.0
  %388 = vmatprep.subr.mxu0 0.0
  %389 = vmatpush1.msra.mxu0 0.0
  %390 = vmatprep.subr.mxu0 0.0
  %391 = vmatpush1.msra.mxu0 0.0
  %392 = vmatprep.subr.mxu0 0.0
  %393 = vmatpush1.msra.mxu0 0.0
  %394 = vmatprep.subr.mxu0 0.0
  %395 = vmatpush1.msra.mxu0 0.0
  %396 = vmatprep.subr.mxu0 0.0
  %397 = vmatpush1.msra.mxu0 0.0
  %398 = vmatprep.subr.mxu0 0.0
  %399 = vmatpush1.msra.mxu0 0.0
  %400 = vmatprep.subr.mxu0 0.0
  %401 = vmatpush1.msra.mxu0 0.0
  %402 = vmatprep.subr.mxu0 0.0
  %403 = vmatpush1.msra.mxu0 0.0
  %404 = vmatprep.subr.mxu0 0.0
  %405 = vmatpush1.msra.mxu0 0.0
  %406 = vmatprep.subr.mxu0 0.0
  %407 = vmatpush1.msra.mxu0 0.0
  %408 = vmatprep.subr.mxu0 0.0
  %409 = vmatpush1.msra.mxu0 0.0
  %410 = vmatprep.subr.mxu0 0.0
  %411 = vmatpush1.msra.mxu0 0.0
  %412 = vmatprep.subr.mxu0 0.0
  %413 = vmatpush1.msra.mxu0 0.0
  %414 = vmatprep.subr.mxu0 0.0
  %415 = vmatpush1.msra.mxu0 0.0
  %416 = vmatprep.subr.mxu0 0.0
  %417 = vmatpush1.msra.mxu0 0.0
  %418 = vmatprep.mubr.f32.mxu0 0.0
  %419 = vmatmul.mubr.f32.gmra.mrb[0].mxu0 %v349
  %v420 = vpop.f32.mrb[0].mxu0
  %v421 = vadd.f32 0.0, %v420
  %v422 = vpop.f32.mrb[0].mxu0
  %423 = vmatprep.mubr.f32.mxu0 0.0
  %424 = vmatmul.mubr.f32.gmra.mrb[0].mxu0 %v352
  %v425 = vpop.f32.mrb[0].mxu0
  %v426 = vadd.f32 0.0, %v425
  %v427 = vpop.f32.mrb[0].mxu0
  %428 = vdwg.mxu0
  %v429 = vld [vmem:[%s6] sm:$0xff]
  %v430 = vld [vmem:[%s6 + $0x8] sm:$0xff]
  %v431 = vmul.f32 %v421, %v421
  %v432 = vmul.f32 %v426, %v426
  %434 = vset.pattern.permute.xlu0 0
  %435 = vperm.xlu0 %434, %v429
  %v436 = vpop.permute.xlu0 %435
  %439 = vset.pattern.permute.xlu0 0
  %440 = vperm.xlu0 %439, %v430
  %v441 = vpop.permute.xlu0 %440
  %v443 = vmul.f32 %v436, %v431
  %v444 = vmul.f32 %v441, %v432
  %v445 = vadd.f32 %v443, %v444
  %v446 = vrot.slane %v445, 4
  %v447 = vadd.f32 %v445, %v446
  %v448 = vrot.slane %v447, 2
  %v449 = vadd.f32 %v447, %v448
  %v450 = vrot.slane %v449, 1
  %v451 = vadd.f32 %v449, %v450
  %452 = vst [vmem:[%s7] sm:$0x1] %v451
  // Predicated region
  $region30: #{hqgnn_forward.1} parent=0 // pred_check
    _
  $region31: #{hqgnn_forward.1} parent=0 // pred_check_branch
    %454 = sbr.rel (0) target = $region33
  $region32: #{hqgnn_forward.1} parent=0 // pred_region
    _
  $region33: #{hqgnn_forward.1} parent=0 // pred_fallthru
    _
  // Predicated region
  $region34: #{hqgnn_forward.1} parent=0 // pred_check
    _
  $region35: #{hqgnn_forward.1} parent=0 // pred_check_branch
    %456 = sbr.rel (0) target = $region37
  $region36: #{hqgnn_forward.1} parent=0 // pred_region
    _
  $region37: #{hqgnn_forward.1} parent=0 // pred_fallthru
    _

</llo_original>
